<compile_context>
chip_gen: v7x
topology: tpu7x:2x2x1
jax: 0.10.0
libtpu: 0.0.40
codegen_flags: <defaults>
</compile_context>

<pallas_src>
import jax
import jax.numpy as jnp
from jax import lax
from jax.experimental import pallas as pl
from jax.experimental.pallas import tpu as pltpu

EPS = 1e-3                                  # nn.BatchNorm2d(nIn, eps=0.001)
_LANE = 128
_SUBLANE = 8
_MIN_PARALLEL_TILE_ELEMS = (1 << 20) // 4   # keep >=~1 MiB tiles when splitting N


# --------------------------------- kernels ---------------------------------- #

def _sum_over_batch(t):
    """Sum over the leading (TN / N) axis; cheap squeeze when it is size 1."""
    return t[0] if t.shape[0] == 1 else jnp.sum(t, axis=0)


def _stats_kernel(x_ref, sum_ref, sq_ref):
    """Accumulate per-channel sum / sum-of-squares for one N-shard.

    x_ref:  (TN, C, TM) or (TN, C, G, 128) tile of the input.
    sum_ref/sq_ref: (C, 1) or (C, 128) f32 accumulators, resident across the HW
    grid axis (axis 1); one output slab per N-shard (grid axis 0).
    """
    @pl.when(pl.program_id(1) == 0)
    def _init():
        sum_ref[...] = jnp.zeros_like(sum_ref)
        sq_ref[...] = jnp.zeros_like(sq_ref)

    x = x_ref[...].astype(jnp.float32)
    s = _sum_over_batch(x)              # (C, TM) or (C, G, 128): VPU adds
    q = _sum_over_batch(x * x)
    if s.ndim == 3:                     # lane-dense path: keep the 128-lane axis
        s = jnp.sum(s, axis=1)          # (C, 128)
        q = jnp.sum(q, axis=1)
    else:                               # fallback: full reduce to (C, 1)
        s = jnp.sum(s, axis=1, keepdims=True)
        q = jnp.sum(q, axis=1, keepdims=True)
    sum_ref[...] += s
    sq_ref[...] += q


def _norm_prelu_kernel(x_ref, p_ref, o_ref):
    """z = x * scale + shift ; y = where(z >= 0, z, alpha * z)   (elementwise)."""
    x = x_ref[...].astype(jnp.float32)
    scale = p_ref[0]                    # (1, C, 1[, 1]) broadcasts against the tile
    shift = p_ref[1]
    alpha = p_ref[2]
    z = x * scale + shift
    o_ref[...] = jnp.where(z >= 0.0, z, alpha * z).astype(o_ref.dtype)


def _fused_kernel(x_ref, p_ref, o_ref):
    """Whole-tensor-in-VMEM fast path: stats + normalize + PReLU in one call."""
    x = x_ref[...].astype(jnp.float32)                              # (N, C, HW)
    inv_cnt = 1.0 / (x_ref.shape[0] * x_ref.shape[2])
    mean = jnp.sum(_sum_over_batch(x), axis=-1, keepdims=True) * inv_cnt     # (C, 1)
    xc = x - mean
    var = jnp.sum(_sum_over_batch(xc * xc), axis=-1, keepdims=True) * inv_cnt
    inv_std = lax.rsqrt(var + EPS)                                  # (C, 1)
    gamma = p_ref[0]                                                # (1, C, 1)
    beta = p_ref[1]
    alpha = p_ref[2]
    z = xc * (gamma * inv_std) + beta
    o_ref[...] = jnp.where(z >= 0.0, z, alpha * z).astype(o_ref.dtype)


# ------------------------------ tiling helpers ------------------------------- #

def _divisors_desc(n):
    return [d for d in range(n, 0, -1) if n % d == 0]


def _pick_hw_tiling(hw, c, target_elems):
    """Choose the HW tiling.  Returns (use_4d, tile):
      use_4d=True  -> input viewed as (N, C, hw//128, 128); tile = G lane-groups
      use_4d=False -> input kept as (N, C, hw);             tile = TM elements
    """
    if hw % _LANE == 0:
        g_total = hw // _LANE
        max_g = max(1, target_elems // (c * _LANE))
        if g_total <= max_g:
            return True, g_total
        start = (max_g // _SUBLANE) * _SUBLANE
        for g in range(start, 0, -_SUBLANE):        # second-minor block dim must be a
            if g_total % g == 0:                    # multiple of 8 (or the full extent)
                return True, g
        # no legal lane-dense sub-tile within budget -> fall through to 3D tiling
    max_tm = (min(max(target_elems // max(c, 1), _LANE), hw) // _LANE) * _LANE
    for tm in range(max_tm, 0, -_LANE):
        if hw % tm == 0:
            return False, tm
    # TODO(synk): hw has no multiple-of-128 divisor; the full row is used, which
    # means masked stores in pass 2 and (for very large hw) a budget overshoot.
    return False, hw


def _pick_tn(n, per_n_elems, target_elems):
    fit = [d for d in _divisors_desc(n) if d * per_n_elems <= target_elems]
    tn = fit[0] if fit else 1
    # Prefer leaving >= 2 steps on the N grid axis (pass 1 is megacore-sharded
    # along it on v7x) as long as the tiles stay reasonably large.
    pref = [d for d in fit if n // d >= 2]
    if pref and (pref[0] * per_n_elems >= _MIN_PARALLEL_TILE_ELEMS or pref[0] == tn):
        tn = pref[0]
    return tn


def _pack_params(vecs, c, view_ndim):
    """Fuse per-channel vectors into one (3, 1, C, 1[,1]) f32 slab."""
    p = jnp.stack([jnp.asarray(v).reshape(c).astype(jnp.float32) for v in vecs], axis=0)
    return p.reshape((3, 1, c) + (1,) * (view_ndim - 2))


# --------------------------------- wrapper ----------------------------------- #

def bn_prelu(x_nchw, gamma, beta, alpha, *,
             force_two_pass=False,
             tile_budget_bytes=6 << 20,     # per-tile budget (f32-equivalent elements)
             vmem_limit_bytes=48 << 20,     # safe on v7x; raise further on v5e/v6e
             fused_max_bytes=4 << 20):
    """x_nchw: (N, C, H, W); gamma/beta/alpha: (C,). Returns (N, C, H, W)."""
    N, C, H, W = x_nchw.shape
    HW = H * W
    count = float(N * HW)
    x3 = x_nchw.reshape(N, C, HW)           # free reshape — no HBM transpose

    # ---- Fused fast path: whole tensor resident in VMEM (2x HBM traffic). ----
    if not force_two_pass and 4 * N * C * HW <= fused_max_bytes:
        params = _pack_params([gamma, beta, alpha], C, 3)
        out = pl.pallas_call(
            _fused_kernel,
            out_shape=jax.ShapeDtypeStruct((N, C, HW), x_nchw.dtype),
            grid=(1,),
            in_specs=[pl.BlockSpec((N, C, HW), lambda i: (0, 0, 0)),
                      pl.BlockSpec(params.shape, lambda i: (0, 0, 0, 0))],
            out_specs=pl.BlockSpec((N, C, HW), lambda i: (0, 0, 0)),
            compiler_params=pltpu.CompilerParams(
                dimension_semantics=("arbitrary",),
                vmem_limit_bytes=vmem_limit_bytes),
        )(x3, params)
        return out.reshape(N, C, H, W)

    # ---- Streaming two-pass path. ----
    # NOTE: budget is counted in f32-equivalent elements so in-kernel f32
    # temporaries stay within vmem_limit even for bf16 inputs (bf16 tiles end up
    # half the stored bytes of f32 tiles).
    target_elems = max(_LANE, tile_budget_bytes // 4)
    use_4d, hw_tile = _pick_hw_tiling(HW, C, target_elems)

    if use_4d:
        g_total = HW // _LANE
        G = hw_tile
        x_view = x3.reshape(N, C, g_total, _LANE)
        TN = _pick_tn(N, C * G * _LANE, target_elems)
        grid = (N // TN, g_total // G)
        x_spec = pl.BlockSpec((TN, C, G, _LANE), lambda n, m: (n, 0, m, 0))
        acc_w = _LANE
    else:
        TM = hw_tile
        x_view = x3
        TN = _pick_tn(N, C * TM, target_elems)
        grid = (N // TN, HW // TM)
        x_spec = pl.BlockSpec((TN, C, TM), lambda n, m: (n, 0, m))
        acc_w = 1

    grid_n = grid[0]
    acc_spec = pl.BlockSpec((None, C, acc_w), lambda n, m: (n, 0, 0))

    # Pass 1: per-channel sum / sum-of-squares, one partial slab per N-shard.
    sums, sqs = pl.pallas_call(
        _stats_kernel,
        out_shape=(jax.ShapeDtypeStruct((grid_n, C, acc_w), jnp.float32),
                   jax.ShapeDtypeStruct((grid_n, C, acc_w), jnp.float32)),
        grid=grid,
        in_specs=[x_spec],
        out_specs=(acc_spec, acc_spec),
        compiler_params=pltpu.CompilerParams(
            dimension_semantics=("parallel", "arbitrary"),
            vmem_limit_bytes=vmem_limit_bytes),
    )(x_view)

    # Tiny O(C) glue in plain JAX: combine shards, mean/var -> scale/shift.
    total = jnp.sum(sums, axis=(0, 2))
    total_sq = jnp.sum(sqs, axis=(0, 2))
    mean = total / count
    var = jnp.maximum(total_sq / count - mean * mean, 0.0)        # biased variance
    inv_std = lax.rsqrt(var + EPS)
    scale = gamma.reshape(C).astype(jnp.float32) * inv_std
    shift = beta.reshape(C).astype(jnp.float32) - mean * scale
    params = _pack_params([scale, shift, alpha], C, x_view.ndim)
    p_spec = pl.BlockSpec(params.shape, lambda n, m: (0,) * params.ndim)

    # Pass 2: elementwise normalize + PReLU; fully parallel grid, lane-dense
    # output tiles (except the HW % 128 != 0 fallback).
    out = pl.pallas_call(
        _norm_prelu_kernel,
        out_shape=jax.ShapeDtypeStruct(x_view.shape, x_nchw.dtype),
        grid=grid,
        in_specs=[x_spec, p_spec],
        out_specs=x_spec,
        compiler_params=pltpu.CompilerParams(
            dimension_semantics=("parallel", "parallel"),
            vmem_limit_bytes=vmem_limit_bytes),
    )(x_view, params)

    return out.reshape(N, C, H, W)


# ---------------------------- reference / test ------------------------------- #

def _reference(x, gamma, beta, alpha):
    xf = x.astype(jnp.float32)
    mean = jnp.mean(xf, axis=(0, 2, 3), keepdims=True)
    var = jnp.mean((xf - mean) ** 2, axis=(0, 2, 3), keepdims=True)
    z = (xf - mean) * lax.rsqrt(var + EPS)
    z = z * gamma[None, :, None, None] + beta[None, :, None, None]
    y = jnp.where(z >= 0, z, alpha[None, :, None, None] * z)
    return y.astype(x.dtype)


def _check(x, gamma, beta, alpha, name, **kw):
    out = jax.block_until_ready(bn_prelu(x, gamma, beta, alpha, **kw))
    ref = _reference(x, gamma, beta, alpha)
    assert out.shape == x.shape, f"{name}: bad shape {out.shape}"
    assert jnp.allclose(out, ref, atol=2e-4, rtol=2e-4), f"{name}: mismatch vs reference"


if __name__ == "__main__":
    key = jax.random.PRNGKey(0)
    cases = [
        # (shape, kwargs) — exercise fused, 4D lane-dense, multi-step, 3D-fallback paths.
        ((2, 4, 16, 16), dict()),                                    # fused fast path
        ((2, 4, 16, 16), dict(force_two_pass=True)),                 # 4D path, single step
        ((2, 8, 64, 64), dict(force_two_pass=True,
                              tile_budget_bytes=32 * 1024)),         # 4D path, grid (2, 4)
        ((4, 8, 6, 6), dict(force_two_pass=True)),                   # 3D fallback (HW % 128 != 0)
    ]
    for i, (shape, kw) in enumerate(cases):
        key, kx, kg, kb = jax.random.split(key, 4)
        N, C, H, W = shape
        # Non-zero-mean data to exercise the E[x^2]-mean^2 path away from N(0,1).
        x = 1.5 * jax.random.normal(kx, shape, dtype=jnp.float32) + 2.0
        gamma = 1.0 + 0.1 * jax.random.normal(kg, (C,), dtype=jnp.float32)
        beta = 0.1 * jax.random.normal(kb, (C,), dtype=jnp.float32)
        alpha = jnp.full((C,), 0.25, dtype=jnp.float32)              # nn.PReLU default
        _check(x, gamma, beta, alpha, f"case{i}", **kw)

    print("KERNEL_OK")
</pallas_src>

<mosaic_0001>
module attributes {stable_mosaic.version = 11 : i64} {
  func.func @_fused_kernel(%arg0: i32, %arg1: memref<2x4x256xf32, #tpu.memory_space<vmem>>, %arg2: memref<3x1x4x1xf32, #tpu.memory_space<vmem>>, %arg3: memref<2x4x256xf32, #tpu.memory_space<vmem>>) attributes {dimension_semantics = [#tpu.dimension_semantics<arbitrary>], iteration_bounds = array<i64: 1>, scalar_prefetch = 0 : i64, scratch_operands = 0 : i64, tpu.core_type = #tpu.core_type<tc>, window_params = [{pipeline_mode = #tpu.pipeline_mode<synchronous>, transform_indices = @transform_0, window_bounds = array<i64: 2, 4, 256>}, {pipeline_mode = #tpu.pipeline_mode<synchronous>, transform_indices = @transform_1, window_bounds = array<i64: 3, 1, 4, 1>}, {pipeline_mode = #tpu.pipeline_mode<synchronous>, transform_indices = @transform_2, window_bounds = array<i64: 2, 4, 256>}]} {
    %c0 = arith.constant 0 : index
    %c0_0 = arith.constant 0 : index
    %c0_1 = arith.constant 0 : index
    %0 = vector.load %arg1[%c0, %c0_0, %c0_1] : memref<2x4x256xf32, #tpu.memory_space<vmem>>, vector<2x4x256xf32>
    %cst = arith.constant dense<0.000000e+00> : vector<4x256xf32>
    %1 = vector.multi_reduction <add>, %0, %cst [0] : vector<2x4x256xf32> to vector<4x256xf32>
    %cst_2 = arith.constant dense<0.000000e+00> : vector<4xf32>
    %2 = vector.multi_reduction <add>, %1, %cst_2 [1] : vector<4x256xf32> to vector<4xf32>
    %3 = vector.shape_cast %2 : vector<4xf32> to vector<4x1xf32>
    %cst_3 = arith.constant 0.001953125 : f32
    %4 = vector.broadcast %cst_3 : f32 to vector<4x1xf32>
    %5 = arith.mulf %3, %4 : vector<4x1xf32>
    %6 = vector.shape_cast %5 : vector<4x1xf32> to vector<1x4x1xf32>
    %7 = vector.broadcast %6 : vector<1x4x1xf32> to vector<2x4x256xf32>
    %8 = arith.subf %0, %7 : vector<2x4x256xf32>
    %9 = arith.mulf %8, %8 : vector<2x4x256xf32>
    %cst_4 = arith.constant dense<0.000000e+00> : vector<4x256xf32>
    %10 = vector.multi_reduction <add>, %9, %cst_4 [0] : vector<2x4x256xf32> to vector<4x256xf32>
    %cst_5 = arith.constant dense<0.000000e+00> : vector<4xf32>
    %11 = vector.multi_reduction <add>, %10, %cst_5 [1] : vector<4x256xf32> to vector<4xf32>
    %12 = vector.shape_cast %11 : vector<4xf32> to vector<4x1xf32>
    %cst_6 = arith.constant 0.001953125 : f32
    %13 = vector.broadcast %cst_6 : f32 to vector<4x1xf32>
    %14 = arith.mulf %12, %13 : vector<4x1xf32>
    %cst_7 = arith.constant 1.000000e-03 : f32
    %15 = vector.broadcast %cst_7 : f32 to vector<4x1xf32>
    %16 = arith.addf %14, %15 : vector<4x1xf32>
    %17 = math.rsqrt %16 : vector<4x1xf32>
    %c0_8 = arith.constant 0 : index
    %c0_9 = arith.constant 0 : index
    %c0_10 = arith.constant 0 : index
    %c0_11 = arith.constant 0 : index
    %18 = vector.load %arg2[%c0_8, %c0_9, %c0_10, %c0_11] : memref<3x1x4x1xf32, #tpu.memory_space<vmem>>, vector<1x1x4x1xf32>
    %19 = vector.shape_cast %18 : vector<1x1x4x1xf32> to vector<1x4x1xf32>
    %c1 = arith.constant 1 : index
    %c0_12 = arith.constant 0 : index
    %c0_13 = arith.constant 0 : index
    %c0_14 = arith.constant 0 : index
    %20 = vector.load %arg2[%c1, %c0_12, %c0_13, %c0_14] : memref<3x1x4x1xf32, #tpu.memory_space<vmem>>, vector<1x1x4x1xf32>
    %21 = vector.shape_cast %20 : vector<1x1x4x1xf32> to vector<1x4x1xf32>
    %c2 = arith.constant 2 : index
    %c0_15 = arith.constant 0 : index
    %c0_16 = arith.constant 0 : index
    %c0_17 = arith.constant 0 : index
    %22 = vector.load %arg2[%c2, %c0_15, %c0_16, %c0_17] : memref<3x1x4x1xf32, #tpu.memory_space<vmem>>, vector<1x1x4x1xf32>
    %23 = vector.shape_cast %22 : vector<1x1x4x1xf32> to vector<1x4x1xf32>
    %24 = vector.shape_cast %17 : vector<4x1xf32> to vector<1x4x1xf32>
    %25 = arith.mulf %19, %24 : vector<1x4x1xf32>
    %26 = vector.broadcast %25 : vector<1x4x1xf32> to vector<2x4x256xf32>
    %27 = arith.mulf %8, %26 : vector<2x4x256xf32>
    %28 = vector.broadcast %21 : vector<1x4x1xf32> to vector<2x4x256xf32>
    %29 = arith.addf %27, %28 : vector<2x4x256xf32>
    %cst_18 = arith.constant 0.000000e+00 : f32
    %30 = vector.broadcast %cst_18 : f32 to vector<2x4x256xf32>
    %31 = arith.cmpf oge, %29, %30 : vector<2x4x256xf32>
    %32 = vector.broadcast %23 : vector<1x4x1xf32> to vector<2x4x256xf32>
    %33 = arith.mulf %32, %29 : vector<2x4x256xf32>
    %34 = arith.select %31, %29, %33 : vector<2x4x256xi1>, vector<2x4x256xf32>
    %c0_19 = arith.constant 0 : index
    %c0_20 = arith.constant 0 : index
    %c0_21 = arith.constant 0 : index
    %35 = vector.load %arg3[%c0_19, %c0_20, %c0_21] : memref<2x4x256xf32, #tpu.memory_space<vmem>>, vector<2x4x256xf32>
    tpu.vector_store %arg3[%c0_19, %c0_20, %c0_21], %34 {strides = array<i32>} : memref<2x4x256xf32, #tpu.memory_space<vmem>>, vector<2x4x256xf32>,
    return
  }
  func.func @transform_0(%arg0: i32) -> (i32, i32, i32) {
    %c0_i32 = arith.constant 0 : i32
    %c0_i32_0 = arith.constant 0 : i32
    %c0_i32_1 = arith.constant 0 : i32
    %c0_i32_2 = arith.constant 0 : i32
    return %c0_i32, %c0_i32_0, %c0_i32_1 : i32, i32, i32
  }
  func.func @transform_1(%arg0: i32) -> (i32, i32, i32, i32) {
    %c0_i32 = arith.constant 0 : i32
    %c0_i32_0 = arith.constant 0 : i32
    %c0_i32_1 = arith.constant 0 : i32
    %c0_i32_2 = arith.constant 0 : i32
    %c0_i32_3 = arith.constant 0 : i32
    return %c0_i32, %c0_i32_0, %c0_i32_1, %c0_i32_2 : i32, i32, i32, i32
  }
  func.func @transform_2(%arg0: i32) -> (i32, i32, i32) {
    %c0_i32 = arith.constant 0 : i32
    %c0_i32_0 = arith.constant 0 : i32
    %c0_i32_1 = arith.constant 0 : i32
    %c0_i32_2 = arith.constant 0 : i32
    return %c0_i32, %c0_i32_0, %c0_i32_1 : i32, i32, i32
  }
}

</mosaic_0001>

<llo_original>
// kernel: tpu_custom_call.1
$region0: #{tpu_custom_call.1}
  #allocation0 [shape = 'u32[]', space=smem, size = 0x4, offset = 0x4, fixed_abs, tag = 'smem constant byte address 0x4 - core index']
  #allocation1 [shape = 'u32[144,128]{1,0:T(1,128)}', space=vmem, size = 0x12000, scoped, tag = 'internal scratch']
  %s0 = inlined_call_operand.hbm [shape: f32[2,4,256], index: 0, kind: input, shape index: {}]
  %s1 = inlined_call_operand.vmem [shape: f32[3,1,4,1], index: 1, kind: input, shape index: {}]
  %s2 = inlined_call_operand.hbm [shape: f32[2,4,256], index: 2, kind: output, shape index: {}]
  %s3 = sld [smem:[#allocation0]]
  $region22: #{tpu_custom_call.1} parent=0
    _
  %s5 = ssub.s32 1, %s3
  %s6 = scalar_select 0, %s5, %s3
  $region1: #{tpu_custom_call.1} parent=0
    #allocation2 [shape = 'u8[8192]{0}', space=vmem, size = 0x2000, scoped, tag = 'input window, operand 0, single buffered']
    #allocation3 [shape = 's32[1]{0}', space=sflag, size = 0x4, scoped, tag = 'scoped memory for tpu_custom_call.1']
    #allocation4 [shape = 's32[1]{0}', space=sflag, size = 0x4, scoped, tag = 'scoped memory for tpu_custom_call.1']
    #allocation5 [shape = 'u8[8192]{0}', space=vmem, size = 0x2000, scoped, tag = 'output window, operand 0, single buffered']
    %7 = vsyncpa [#allocation3], 0
    %8 = vsyncpa [#allocation4], 0
    // Predicated region
    $region2: #{tpu_custom_call.1} parent=1 // pred_check
      _
    $region3: #{tpu_custom_call.1} parent=1 // pred_check_branch
      %10 = sbr.rel (0) target = $region5
    $region4: #{tpu_custom_call.1} parent=1 // pred_region
      %s12 = ssub.s32 256, 256
      %13 = vsyncadd [#allocation3], %s12
      %s14 = sshll.u32 [#allocation2], 4
      %s15 = int_to_ptr.vmem [resolvable:$true] %s14
      %20 = dma.hbm_to_vmem [thread:$0]  %s0, 256, %s15, [#allocation3], 128, 128, 8
    $region5: #{tpu_custom_call.1} parent=1 // pred_fallthru
      _
    // Predicated region
    $region6: #{tpu_custom_call.1} parent=1 // pred_check
      _
    $region7: #{tpu_custom_call.1} parent=1 // pred_check_branch
      %22 = sbr.rel (0) target = $region9
    $region8: #{tpu_custom_call.1} parent=1 // pred_region
      _
    $region9: #{tpu_custom_call.1} parent=1 // pred_fallthru
      _
    // Predicated region
    $region10: #{tpu_custom_call.1} parent=1 // pred_check
      _
    $region11: #{tpu_custom_call.1} parent=1 // pred_check_branch
      %24 = sbr.rel (0) target = $region13
    $region12: #{tpu_custom_call.1} parent=1 // pred_region
      %25 = dma.done [#allocation3], 256
    $region13: #{tpu_custom_call.1} parent=1 // pred_fallthru
      _
    %v26 = vld [vmem:[#allocation2] sm:$0xff]
    %v27 = vld [vmem:[#allocation2 + $0x8] sm:$0xff]
    %v30 = vcombine.high %v26, %v26
    %v31 = vcombine.high %v27, %v27
    %vm34 = vcmask 1043456
    %v35 = vsel %vm34, %v26, 0.0
    %v36 = vsel %vm34, %v27, 0.0
    %v37 = vadd.f32 %v35, %v36
    %v38 = vsel %vm34, %v30, 0.0
    %v39 = vsel %vm34, %v31, 0.0
    %v40 = vadd.f32 %v38, %v39
    %v41 = vsel %vm34, %v37, 0.0
    %v42 = vsel %vm34, %v40, 0.0
    %v43 = vadd.f32 %v41, %v42
    %44 = vadd.xlane.f32.xlu0 %v43
    %v45 = vpop.xlane.xlu0 %44
    %v46 = vmul.f32 %v45, 0.001953125
    %v49 = vunpack.c.l.s4 839922192
    %v50 = vunpack.c.0.s8 %v49
    %v51 = vlaneseq
    %v52 = vshrl.u32 %v51, 7
    %v53 = vsub.s32 %v50, %v52
    %v54 = vrot.slane %v46, %v53
    %v56 = vsub.f32 %v26, %v54
    %v57 = vsub.f32 %v27, %v54
    %v58 = vmul.f32 %v56, %v56
    %v59 = vmul.f32 %v57, %v57
    %v62 = vcombine.high %v58, %v58
    %v63 = vcombine.high %v59, %v59
    %v66 = vsel %vm34, %v58, 0.0
    %v67 = vsel %vm34, %v59, 0.0
    %v68 = vadd.f32 %v66, %v67
    %v69 = vsel %vm34, %v62, 0.0
    %v70 = vsel %vm34, %v63, 0.0
    %v71 = vadd.f32 %v69, %v70
    %v72 = vsel %vm34, %v68, 0.0
    %v73 = vsel %vm34, %v71, 0.0
    %v74 = vadd.f32 %v72, %v73
    %75 = vadd.xlane.f32.xlu0 %v74
    %v76 = vpop.xlane.xlu0 %75
    %v77 = vmul.f32 %v76, 0.001953125
    %v78 = vadd.f32 %v77, 0.001
    %v79 = vrsqrt.pop %v78
    %v80 = vld [vmem:[%s1] sm:$0xf]
    %s81 = scalar_lea.vmem %s1, 4
    %v82 = vld [vmem:[%s81] sm:$0xf]
    %s83 = scalar_lea.vmem %s1, 8
    %v84 = vld [vmem:[%s83] sm:$0xf]
    %v85 = vmul.f32 %v80, %v79
    %87 = vset.pattern.permute.xlu0 0
    %88 = vperm.xlu0 %87, %v85
    %v89 = vpop.permute.xlu0 %88
    %v91 = vunpack.c.l.s4 839922192
    %v92 = vunpack.c.0.s8 %v91
    %v93 = vlaneseq
    %v94 = vshrl.u32 %v93, 7
    %v95 = vsub.s32 %v92, %v94
    %v96 = vrot.slane %v89, %v95
    %v98 = vmul.f32 %v56, %v96
    %v99 = vmul.f32 %v57, %v96
    %101 = vset.pattern.permute.xlu0 0
    %102 = vperm.xlu0 %101, %v82
    %v103 = vpop.permute.xlu0 %102
    %v105 = vunpack.c.l.s4 839922192
    %v106 = vunpack.c.0.s8 %v105
    %v107 = vlaneseq
    %v108 = vshrl.u32 %v107, 7
    %v109 = vsub.s32 %v106, %v108
    %v110 = vrot.slane %v103, %v109
    %v112 = vadd.f32 %v98, %v110
    %v113 = vadd.f32 %v99, %v110
    %vm114 = vcmp.ge.f32.partialorder %v112, 0.0
    %vm115 = vcmp.ge.f32.partialorder %v113, 0.0
    %117 = vset.pattern.permute.xlu0 0
    %118 = vperm.xlu0 %117, %v84
    %v119 = vpop.permute.xlu0 %118
    %v123 = vcombine.high %v112, %v112
    %v124 = vcombine.high %v113, %v113
    %v127 = vmul.f32 %v119, %v112
    %v128 = vmul.f32 %v119, %v123
    %v129 = vmul.f32 %v119, %v113
    %v130 = vmul.f32 %v119, %v124
    %v135 = vcombine.low %v127, %v128
    %v136 = vcombine.low %v129, %v130
    %v139 = vsel %vm114, %v112, %v135
    %v140 = vsel %vm115, %v113, %v136
    %141 = vst [vmem:[#allocation5] sm:$0xff] %v139
    %142 = vst [vmem:[#allocation5 + $0x8] sm:$0xff] %v140
    // Predicated region
    $region14: #{tpu_custom_call.1} parent=1 // pred_check
      _
    $region15: #{tpu_custom_call.1} parent=1 // pred_check_branch
      %144 = sbr.rel (0) target = $region17
    $region16: #{tpu_custom_call.1} parent=1 // pred_region
      %s146 = ssub.s32 256, 256
      %147 = vsyncadd [#allocation4], %s146
      %s148 = sshll.u32 [#allocation5], 4
      %s149 = int_to_ptr.vmem [resolvable:$true] %s148
      %154 = dma.vmem_to_hbm [thread:$0]  %s149, 256, %s2, [#allocation4], 128, 128, 8
    $region17: #{tpu_custom_call.1} parent=1 // pred_fallthru
      _
    // Predicated region
    $region18: #{tpu_custom_call.1} parent=1 // pred_check
      _
    $region19: #{tpu_custom_call.1} parent=1 // pred_check_branch
      %156 = sbr.rel (0) target = $region21
    $region20: #{tpu_custom_call.1} parent=1 // pred_region
      %157 = dma.done [#allocation4], 256
    $region21: #{tpu_custom_call.1} parent=1 // pred_fallthru
      _
    %158 = vsyncpa [#allocation3], 1
    %159 = vsyncpa [#allocation4], 1

</llo_original>
